<compile_context>
chip_gen: v6e
topology: v6e:2x2x1
jax: 0.10.0
libtpu: 0.0.40
codegen_flags: <defaults>
</compile_context>

<pallas_src>
import jax
import jax.numpy as jnp
from jax.experimental import pallas as pl
from jax.experimental.pallas import tpu as pltpu


def _round_up(x, m):
    return (x + m - 1) // m * m


# --------------------------------------------------------------------------- #
# Kernel
# --------------------------------------------------------------------------- #
def _svd_linear_kernel(x_ref, wbT_ref, waT_ref, b_ref, o_ref, y_ref):
    """Computes one (tm, tn) output tile.

    x_ref:   (tm, in_p)      bf16 input rows (same block for all j)
    wbT_ref: (in_p, rank_p)  bf16 BLinear.weight.T  (whole, grid-invariant)
    waT_ref: (rank_p, tn)    bf16 ALinear.weight.T  (out-feature tile)
    b_ref:   (1, tn)         f32  bias tile
    o_ref:   (tm, tn)        output tile
    y_ref:   (tm, rank_p)    VMEM scratch caching y = x @ wbT across j
    """
    # j (out-feature tiles) is the trailing "arbitrary" (sequential, innermost)
    # grid axis, so y only needs to be (re)computed when a new row tile starts.
    @pl.when(pl.program_id(1) == 0)
    def _():
        y = jnp.dot(x_ref[...], wbT_ref[...],
                    preferred_element_type=jnp.float32)
        y_ref[...] = y.astype(y_ref.dtype)

    out = jnp.dot(y_ref[...], waT_ref[...],
                  preferred_element_type=jnp.float32)
    o_ref[...] = (out + b_ref[...]).astype(o_ref.dtype)


# --------------------------------------------------------------------------- #
# One-time weight preparation (hoisted out of the forward path)
# --------------------------------------------------------------------------- #
def prepare_svd_linear(wbT, waT, bias=None, *, tn=512):
    """Pad + bf16-cast the fused SVD factors once.

    wbT: (in_features, rank)  == BLinear.weight.T
    waT: (rank, out_features) == ALinear.weight.T
    """
    in_features, rank = wbT.shape
    rank2, out_features = waT.shape
    assert rank == rank2, (wbT.shape, waT.shape)

    in_p = _round_up(in_features, 128)
    rank_p = _round_up(rank, 128)
    # Output tile: multiple of 128; pad out_features up to a multiple of it
    # (instead of collapsing tn to 128, which underfills the 256-wide MXU).
    tn = _round_up(max(128, min(tn, _round_up(out_features, 128))), 128)
    out_p = _round_up(out_features, tn)

    wbT_p = jnp.pad(wbT.astype(jnp.bfloat16),
                    ((0, in_p - in_features), (0, rank_p - rank)))
    waT_p = jnp.pad(waT.astype(jnp.bfloat16),
                    ((0, rank_p - rank), (0, out_p - out_features)))
    if bias is None:
        bias = jnp.zeros((out_features,), jnp.float32)
    b_p = jnp.pad(bias.astype(jnp.float32),
                  (0, out_p - out_features)).reshape(1, out_p)

    return {
        "wbT_p": wbT_p, "waT_p": waT_p, "b_p": b_p,
        "in_features": in_features, "rank": rank,
        "out_features": out_features, "tn": tn,
    }


# --------------------------------------------------------------------------- #
# Forward
# --------------------------------------------------------------------------- #
def svd_linear_forward(x, params, *, tm=512, y_dtype=jnp.bfloat16,
                       out_dtype=None, vmem_budget_bytes=None):
    """x: (..., in_features) -> (..., out_features) using prepared params."""
    wbT_p, waT_p, b_p = params["wbT_p"], params["waT_p"], params["b_p"]
    in_features = params["in_features"]
    out_features = params["out_features"]
    tn = params["tn"]
    in_p, rank_p = wbT_p.shape
    out_p = waT_p.shape[1]
    assert x.shape[-1] == in_features

    lead = x.shape[:-1]
    if out_dtype is None:
        out_dtype = x.dtype      # pass jnp.bfloat16 to halve store bytes (v5e)
    x2d = x.reshape(-1, in_features)
    M = x2d.shape[0]

    # ---- tile sizing / VMEM budget --------------------------------------- #
    if vmem_budget_bytes is None:
        try:                         # v5e/v6e: 128 MiB, v7x: 64 MiB per core
            cap = int(pltpu.get_tpu_info().vmem_capacity_bytes)
        except Exception:
            cap = 64 * 1024 * 1024   # conservative (v7x) if query unavailable
        vmem_budget_bytes = (cap * 3) // 4   # headroom for Mosaic scratch

    out_size = jnp.dtype(out_dtype).itemsize
    y_size = jnp.dtype(y_dtype).itemsize

    def working_set(tm_):
        return (2 * tm_ * in_p * 2          # x tile   (bf16, double-buffered)
                + 1 * in_p * rank_p * 2     # wbT      (bf16, single-buffered)
                + 2 * rank_p * tn * 2       # waT tile (bf16, double-buffered)
                + 2 * tn * 4                # bias tile
                + 2 * tm_ * tn * out_size   # output tile
                + tm_ * rank_p * y_size)    # cached y scratch

    # Row tile: large by default (amortizes ~0.35us/grid-step), clamped for
    # tiny M, shrunk until the working set fits the VMEM budget.
    tm = max(16, min(_round_up(tm, 16), _round_up(M, 16)))
    while working_set(tm) > vmem_budget_bytes and tm > 16:
        tm = max(16, _round_up(tm // 2, 16))
    # TODO(synk): if even tm=16 does not fit (huge in_features on v7x), add a
    # trailing "arbitrary" reduction axis over in_p with an f32 accumulator
    # instead of shrinking tm.

    # Keep >=2 row tiles when M allows so v7x's two TensorCores both get work
    # on the "parallel" axis.
    if M >= 32:
        while _round_up(M, tm) // tm < 2 and tm > 16:
            tm = max(16, _round_up(tm // 2, 16))

    Mp = _round_up(M, tm)

    # ---- x pad/cast (fast path when already lane-aligned bf16) ----------- #
    if M == Mp and in_p == in_features and x2d.dtype == jnp.bfloat16:
        x_p = x2d
    else:
        x_p = jnp.pad(x2d.astype(jnp.bfloat16),
                      ((0, Mp - M), (0, in_p - in_features)))

    grid = (Mp // tm, out_p // tn)

    cost = pl.CostEstimate(
        flops=2 * Mp * in_p * rank_p + 2 * Mp * rank_p * out_p,
        transcendentals=0,
        bytes_accessed=int(x_p.size * 2 + wbT_p.size * 2
                           + waT_p.size * 2 * grid[0]   # re-read per row tile
                           + b_p.size * 4 * grid[0]
                           + Mp * out_p * out_size),
    )

    def call(wbT_pipeline_mode):
        wbT_kwargs = ({"pipeline_mode": wbT_pipeline_mode}
                      if wbT_pipeline_mode is not None else {})
        return pl.pallas_call(
            _svd_linear_kernel,
            out_shape=jax.ShapeDtypeStruct((Mp, out_p), out_dtype),
            grid_spec=pltpu.PrefetchScalarGridSpec(
                num_scalar_prefetch=0,
                grid=grid,
                in_specs=[
                    pl.BlockSpec((tm, in_p), lambda i, j: (i, 0)),
                    pl.BlockSpec((in_p, rank_p), lambda i, j: (0, 0),
                                 **wbT_kwargs),
                    pl.BlockSpec((rank_p, tn), lambda i, j: (0, j)),
                    pl.BlockSpec((1, tn), lambda i, j: (0, j)),
                ],
                out_specs=pl.BlockSpec((tm, tn), lambda i, j: (i, j)),
                scratch_shapes=[pltpu.VMEM((tm, rank_p), y_dtype)],
            ),
            compiler_params=pltpu.CompilerParams(
                # j must be "arbitrary": the cached y is only valid if each
                # core sweeps the full j range per row tile (cores split on i).
                dimension_semantics=("parallel", "arbitrary"),
                vmem_limit_bytes=int(vmem_budget_bytes),
            ),
            cost_estimate=cost,
        )(x_p, wbT_p, waT_p, b_p)

    try:
        # wbT's index_map is constant -> single-buffer it (halves its VMEM
        # footprint; matters most on v7x's 64 MiB/TC).
        out2d = call(pl.Buffered(1))
    except Exception:
        # Fallback for JAX versions without per-operand buffering control.
        out2d = call(None)

    return out2d[:M, :out_features].reshape(*lead, out_features)


# --------------------------------------------------------------------------- #
# Demo / self-check
# --------------------------------------------------------------------------- #
def build_params(key, in_features, out_features, rank, sigma_fuse="UV"):
    """Deterministic synthetic U, S, V, bias -> fused (wbT, waT, bias) in f32."""
    ku, ks, kv, kb = jax.random.split(key, 4)
    U = jax.random.normal(ku, (out_features, rank), jnp.float32) * 0.1
    S = jax.random.uniform(ks, (rank,), jnp.float32, 0.5, 1.5)
    V = jax.random.normal(kv, (in_features, rank), jnp.float32) * 0.1
    bias = jax.random.normal(kb, (out_features,), jnp.float32) * 0.01

    if sigma_fuse == "UV":
        Wa = U * jnp.sqrt(S)[None, :]              # (out, rank)  ALinear.weight
        Wb = V.T * jnp.sqrt(S)[:, None]            # (rank, in)   BLinear.weight
    elif sigma_fuse == "U":
        Wa = U * S[None, :]
        Wb = V.T
    elif sigma_fuse == "V":
        Wa = U
        Wb = V.T * S[:, None]
    else:
        raise ValueError(sigma_fuse)

    return Wb.T, Wa.T, bias   # (in, rank), (rank, out), (out,)


if __name__ == "__main__":
    batch, seq = 2, 8
    in_features, out_features, rank = 32, 32, 8

    key = jax.random.PRNGKey(0)
    kx, kp = jax.random.split(key)
    x = jax.random.normal(kx, (batch, seq, in_features), jnp.float32)

    wbT, waT, bias = build_params(kp, in_features, out_features, rank,
                                  sigma_fuse="UV")

    params = prepare_svd_linear(wbT, waT, bias)   # one-time weight prep
    out = svd_linear_forward(x, params)
    out = jax.block_until_ready(out)

    # Reference check (plain f32 JAX). Kernel streams bf16 -> loose tolerance.
    ref = (x.reshape(-1, in_features) @ wbT @ waT + bias[None, :]).reshape(
        batch, seq, out_features)
    assert out.shape == (batch, seq, out_features)
    assert jnp.allclose(out, ref, atol=5e-2, rtol=5e-2), (
        float(jnp.max(jnp.abs(out - ref))))

    print("KERNEL_OK")
</pallas_src>

<mosaic_0001>
module attributes {stable_mosaic.version = 11 : i64} {
  func.func @_svd_linear_kernel(%arg0: i32, %arg1: i32, %arg2: memref<16x128xbf16, #tpu.memory_space<vmem>>, %arg3: memref<128x128xbf16, #tpu.memory_space<vmem>>, %arg4: memref<128x128xbf16, #tpu.memory_space<vmem>>, %arg5: memref<1x128xf32, #tpu.memory_space<vmem>>, %arg6: memref<16x128xf32, #tpu.memory_space<vmem>>, %arg7: memref<16x128xbf16, #tpu.memory_space<vmem>>) attributes {dimension_semantics = [#tpu.dimension_semantics<parallel>, #tpu.dimension_semantics<arbitrary>], iteration_bounds = array<i64: 1, 1>, scalar_prefetch = 0 : i64, scratch_operands = 1 : i64, tpu.core_type = #tpu.core_type<tc>, window_params = [{transform_indices = @transform_0, window_bounds = array<i64: 16, 128>}, {pipeline_mode = #tpu.pipeline_mode<synchronous>, transform_indices = @transform_1, window_bounds = array<i64: 128, 128>}, {transform_indices = @transform_2, window_bounds = array<i64: 128, 128>}, {transform_indices = @transform_3, window_bounds = array<i64: 1, 128>}, {transform_indices = @transform_4, window_bounds = array<i64: 16, 128>}]} {
    %c0_i32 = arith.constant 0 : i32
    %0 = arith.cmpi eq, %arg1, %c0_i32 : i32
    %1 = arith.extui %0 : i1 to i32
    %c0_i32_0 = arith.constant 0 : i32
    %2 = arith.cmpi ne, %1, %c0_i32_0 : i32
    scf.if %2 {
      %c0_8 = arith.constant 0 : index
      %c0_9 = arith.constant 0 : index
      %10 = vector.load %arg2[%c0_8, %c0_9] : memref<16x128xbf16, #tpu.memory_space<vmem>>, vector<16x128xbf16>
      %c0_10 = arith.constant 0 : index
      %c0_11 = arith.constant 0 : index
      %11 = vector.load %arg3[%c0_10, %c0_11] : memref<128x128xbf16, #tpu.memory_space<vmem>>, vector<128x128xbf16>
      %cst_12 = arith.constant dense<0.000000e+00> : vector<16x128xf32>
      %12 = tpu.matmul %10, %11, %cst_12 {dimension_numbers = #tpu.dot_dimension_numbers<[1], [0], [0], [1], [0, 0, 1, 1], [], []>} : vector<16x128xbf16>, vector<128x128xbf16>, vector<16x128xf32> -> vector<16x128xf32>
      %13 = arith.truncf %12 : vector<16x128xf32> to vector<16x128xbf16>
      %c0_13 = arith.constant 0 : index
      %c0_14 = arith.constant 0 : index
      %14 = vector.load %arg7[%c0_13, %c0_14] : memref<16x128xbf16, #tpu.memory_space<vmem>>, vector<16x128xbf16>
      tpu.vector_store %arg7[%c0_13, %c0_14], %13 {strides = array<i32>} : memref<16x128xbf16, #tpu.memory_space<vmem>>, vector<16x128xbf16>,
    } else {
    }
    %c0 = arith.constant 0 : index
    %c0_1 = arith.constant 0 : index
    %3 = vector.load %arg7[%c0, %c0_1] : memref<16x128xbf16, #tpu.memory_space<vmem>>, vector<16x128xbf16>
    %c0_2 = arith.constant 0 : index
    %c0_3 = arith.constant 0 : index
    %4 = vector.load %arg4[%c0_2, %c0_3] : memref<128x128xbf16, #tpu.memory_space<vmem>>, vector<128x128xbf16>
    %cst = arith.constant dense<0.000000e+00> : vector<16x128xf32>
    %5 = tpu.matmul %3, %4, %cst {dimension_numbers = #tpu.dot_dimension_numbers<[1], [0], [0], [1], [0, 0, 1, 1], [], []>} : vector<16x128xbf16>, vector<128x128xbf16>, vector<16x128xf32> -> vector<16x128xf32>
    %c0_4 = arith.constant 0 : index
    %c0_5 = arith.constant 0 : index
    %6 = vector.load %arg5[%c0_4, %c0_5] : memref<1x128xf32, #tpu.memory_space<vmem>>, vector<1x128xf32>
    %7 = vector.broadcast %6 : vector<1x128xf32> to vector<16x128xf32>
    %8 = arith.addf %5, %7 : vector<16x128xf32>
    %c0_6 = arith.constant 0 : index
    %c0_7 = arith.constant 0 : index
    %9 = vector.load %arg6[%c0_6, %c0_7] : memref<16x128xf32, #tpu.memory_space<vmem>>, vector<16x128xf32>
    tpu.vector_store %arg6[%c0_6, %c0_7], %8 {strides = array<i32>} : memref<16x128xf32, #tpu.memory_space<vmem>>, vector<16x128xf32>,
    return
  }
  func.func @transform_0(%arg0: i32, %arg1: i32) -> (i32, i32) {
    %c0_i32 = arith.constant 0 : i32
    %c0_i32_0 = arith.constant 0 : i32
    return %arg0, %c0_i32 : i32, i32
  }
  func.func @transform_1(%arg0: i32, %arg1: i32) -> (i32, i32) {
    %c0_i32 = arith.constant 0 : i32
    %c0_i32_0 = arith.constant 0 : i32
    %c0_i32_1 = arith.constant 0 : i32
    return %c0_i32, %c0_i32_0 : i32, i32
  }
  func.func @transform_2(%arg0: i32, %arg1: i32) -> (i32, i32) {
    %c0_i32 = arith.constant 0 : i32
    %c0_i32_0 = arith.constant 0 : i32
    return %c0_i32, %arg1 : i32, i32
  }
  func.func @transform_3(%arg0: i32, %arg1: i32) -> (i32, i32) {
    %c0_i32 = arith.constant 0 : i32
    %c0_i32_0 = arith.constant 0 : i32
    return %c0_i32, %arg1 : i32, i32
  }
  func.func @transform_4(%arg0: i32, %arg1: i32) -> (i32, i32) {
    %c0_i32 = arith.constant 0 : i32
    return %arg0, %arg1 : i32, i32
  }
}

module attributes {stable_mosaic.version = 11 : i64} {
  func.func @_svd_linear_kernel(%arg0: i32, %arg1: i32, %arg2: memref<16x128xbf16, #tpu.memory_space<vmem>>, %arg3: memref<128x128xbf16, #tpu.memory_space<vmem>>, %arg4: memref<128x128xbf16, #tpu.memory_space<vmem>>, %arg5: memref<1x128xf32, #tpu.memory_space<vmem>>, %arg6: memref<16x128xf32, #tpu.memory_space<vmem>>, %arg7: memref<16x128xbf16, #tpu.memory_space<vmem>>) attributes {dimension_semantics = [#tpu.dimension_semantics<parallel>, #tpu.dimension_semantics<arbitrary>], iteration_bounds = array<i64: 1, 1>, scalar_prefetch = 0 : i64, scratch_operands = 1 : i64, tpu.core_type = #tpu.core_type<tc>, window_params = [{transform_indices = @transform_0, window_bounds = array<i64: 16, 128>}, {pipeline_mode = #tpu.pipeline_mode<synchronous>, transform_indices = @transform_1, window_bounds = array<i64: 128, 128>}, {transform_indices = @transform_2, window_bounds = array<i64: 128, 128>}, {transform_indices = @transform_3, window_bounds = array<i64: 1, 128>}, {transform_indices = @transform_4, window_bounds = array<i64: 16, 128>}]} {
    %c0_i32 = arith.constant 0 : i32
    %0 = arith.cmpi eq, %arg1, %c0_i32 : i32
    %1 = arith.extui %0 : i1 to i32
    %c0_i32_0 = arith.constant 0 : i32
    %2 = arith.cmpi ne, %1, %c0_i32_0 : i32
    scf.if %2 {
      %c0_8 = arith.constant 0 : index
      %c0_9 = arith.constant 0 : index
      %10 = vector.load %arg2[%c0_8, %c0_9] : memref<16x128xbf16, #tpu.memory_space<vmem>>, vector<16x128xbf16>
      %c0_10 = arith.constant 0 : index
      %c0_11 = arith.constant 0 : index
      %11 = vector.load %arg3[%c0_10, %c0_11] : memref<128x128xbf16, #tpu.memory_space<vmem>>, vector<128x128xbf16>
      %cst_12 = arith.constant dense<0.000000e+00> : vector<16x128xf32>
      %12 = tpu.matmul %10, %11, %cst_12 {dimension_numbers = #tpu.dot_dimension_numbers<[1], [0], [0], [1], [0, 0, 1, 1], [], []>} : vector<16x128xbf16>, vector<128x128xbf16>, vector<16x128xf32> -> vector<16x128xf32>
      %13 = arith.truncf %12 : vector<16x128xf32> to vector<16x128xbf16>
      %c0_13 = arith.constant 0 : index
      %c0_14 = arith.constant 0 : index
      %14 = vector.load %arg7[%c0_13, %c0_14] : memref<16x128xbf16, #tpu.memory_space<vmem>>, vector<16x128xbf16>
      tpu.vector_store %arg7[%c0_13, %c0_14], %13 {strides = array<i32>} : memref<16x128xbf16, #tpu.memory_space<vmem>>, vector<16x128xbf16>,
    } else {
    }
    %c0 = arith.constant 0 : index
    %c0_1 = arith.constant 0 : index
    %3 = vector.load %arg7[%c0, %c0_1] : memref<16x128xbf16, #tpu.memory_space<vmem>>, vector<16x128xbf16>
    %c0_2 = arith.constant 0 : index
    %c0_3 = arith.constant 0 : index
    %4 = vector.load %arg4[%c0_2, %c0_3] : memref<128x128xbf16, #tpu.memory_space<vmem>>, vector<128x128xbf16>
    %cst = arith.constant dense<0.000000e+00> : vector<16x128xf32>
    %5 = tpu.matmul %3, %4, %cst {dimension_numbers = #tpu.dot_dimension_numbers<[1], [0], [0], [1], [0, 0, 1, 1], [], []>} : vector<16x128xbf16>, vector<128x128xbf16>, vector<16x128xf32> -> vector<16x128xf32>
    %c0_4 = arith.constant 0 : index
    %c0_5 = arith.constant 0 : index
    %6 = vector.load %arg5[%c0_4, %c0_5] : memref<1x128xf32, #tpu.memory_space<vmem>>, vector<1x128xf32>
    %7 = vector.broadcast %6 : vector<1x128xf32> to vector<16x128xf32>
    %8 = arith.addf %5, %7 : vector<16x128xf32>
    %c0_6 = arith.constant 0 : index
    %c0_7 = arith.constant 0 : index
    %9 = vector.load %arg6[%c0_6, %c0_7] : memref<16x128xf32, #tpu.memory_space<vmem>>, vector<16x128xf32>
    tpu.vector_store %arg6[%c0_6, %c0_7], %8 {strides = array<i32>} : memref<16x128xf32, #tpu.memory_space<vmem>>, vector<16x128xf32>,
    return
  }
  func.func @transform_0(%arg0: i32, %arg1: i32) -> (i32, i32) {
    %c0_i32 = arith.constant 0 : i32
    %c0_i32_0 = arith.constant 0 : i32
    return %arg0, %c0_i32 : i32, i32
  }
  func.func @transform_1(%arg0: i32, %arg1: i32) -> (i32, i32) {
    %c0_i32 = arith.constant 0 : i32
    %c0_i32_0 = arith.constant 0 : i32
    %c0_i32_1 = arith.constant 0 : i32
    return %c0_i32, %c0_i32_0 : i32, i32
  }
  func.func @transform_2(%arg0: i32, %arg1: i32) -> (i32, i32) {
    %c0_i32 = arith.constant 0 : i32
    %c0_i32_0 = arith.constant 0 : i32
    return %c0_i32, %arg1 : i32, i32
  }
  func.func @transform_3(%arg0: i32, %arg1: i32) -> (i32, i32) {
    %c0_i32 = arith.constant 0 : i32
    %c0_i32_0 = arith.constant 0 : i32
    return %c0_i32, %arg1 : i32, i32
  }
  func.func @transform_4(%arg0: i32, %arg1: i32) -> (i32, i32) {
    %c0_i32 = arith.constant 0 : i32
    return %arg0, %arg1 : i32, i32
  }
}

</mosaic_0001>

<llo_original>
// kernel: tpu_custom_call.1
$region0: #{tpu_custom_call.1}
  #allocation0 [shape = 'u32[]', space=smem, size = 0x4, offset = 0x4, fixed_abs, tag = 'smem constant byte address 0x4 - core index']
  #allocation1 [shape = 'u32[144,128]{1,0:T(1,128)}', space=vmem, size = 0x12000, scoped, tag = 'internal scratch']
  #allocation2 [shape = 'bf16[16,128]{1,0:T(8,128)(2,1)}', space=vmem, size = 0x1000, scoped, tag = 'scratch operand']
  %s0 = inlined_call_operand.hbm [shape: bf16[16,128], index: 0, kind: input, shape index: {}]
  %s1 = inlined_call_operand.hbm [shape: bf16[128,128], index: 1, kind: input, shape index: {}]
  %s2 = inlined_call_operand.hbm [shape: bf16[128,128], index: 2, kind: input, shape index: {}]
  %s3 = inlined_call_operand.vmem [shape: f32[1,128], index: 3, kind: input, shape index: {}]
  %s4 = inlined_call_operand.hbm [shape: f32[16,128], index: 4, kind: output, shape index: {}]
  %s5 = sld [smem:[#allocation0]]
  $region42: #{tpu_custom_call.1} parent=0
    _
  %s7 = ssub.s32 1, %s5
  %s8 = scalar_select 0, %s7, %s5
  $region1: #{tpu_custom_call.1} parent=0
    #allocation3 [shape = 'u8[4096]{0}', space=vmem, size = 0x1000, scoped, tag = 'input window, operand 0, single buffered']
    #allocation4 [shape = 's32[1]{0}', space=sflag, size = 0x4, scoped, tag = 'scoped memory for tpu_custom_call.1']
    #allocation5 [shape = 's32[1]{0}', space=sflag, size = 0x4, scoped, tag = 'scoped memory for tpu_custom_call.1']
    #allocation6 [shape = 'u8[32768]{0}', space=vmem, size = 0x8000, scoped, tag = 'input window, operand 1, single buffered']
    #allocation7 [shape = 's32[1]{0}', space=sflag, size = 0x4, scoped, tag = 'scoped memory for tpu_custom_call.1']
    #allocation8 [shape = 'u8[32768]{0}', space=vmem, size = 0x8000, scoped, tag = 'input window, operand 2, single buffered']
    #allocation9 [shape = 'u8[8192]{0}', space=vmem, size = 0x2000, scoped, tag = 'output window, operand 0, single buffered']
    %9 = vsyncpa [#allocation4], 0
    %10 = vsyncpa [#allocation7], 0
    %11 = vsyncpa [#allocation5], 0
    // Predicated region
    $region2: #{tpu_custom_call.1} parent=1 // pred_check
      _
    $region3: #{tpu_custom_call.1} parent=1 // pred_check_branch
      %13 = sbr.rel (0) target = $region5
    $region4: #{tpu_custom_call.1} parent=1 // pred_region
      %s15 = ssub.s32 128, 128
      %16 = vsyncadd [#allocation4], %s15
      %s17 = sshll.u32 [#allocation3], 4
      %s18 = int_to_ptr.vmem [resolvable:$true] %s17
      %23 = dma.hbm_to_vmem [thread:$0]  %s0, 128, %s18, [#allocation4], 64, 64, 4
    $region5: #{tpu_custom_call.1} parent=1 // pred_fallthru
      _
    // Predicated region
    $region6: #{tpu_custom_call.1} parent=1 // pred_check
      _
    $region7: #{tpu_custom_call.1} parent=1 // pred_check_branch
      %25 = sbr.rel (0) target = $region9
    $region8: #{tpu_custom_call.1} parent=1 // pred_region
      %s27 = ssub.s32 1024, 1024
      %28 = vsyncadd [#allocation7], %s27
      %s29 = sshll.u32 [#allocation6], 4
      %s30 = int_to_ptr.vmem [resolvable:$true] %s29
      %35 = dma.hbm_to_vmem [thread:$0]  %s1, 1024, %s30, [#allocation7], 64, 64, 4
    $region9: #{tpu_custom_call.1} parent=1 // pred_fallthru
      _
    // Predicated region
    $region10: #{tpu_custom_call.1} parent=1 // pred_check
      _
    $region11: #{tpu_custom_call.1} parent=1 // pred_check_branch
      %37 = sbr.rel (0) target = $region13
    $region12: #{tpu_custom_call.1} parent=1 // pred_region
      %s39 = ssub.s32 1024, 1024
      %40 = vsyncadd [#allocation7], %s39
      %s41 = sshll.u32 [#allocation8], 4
      %s42 = int_to_ptr.vmem [resolvable:$true] %s41
      %47 = dma.hbm_to_vmem [thread:$0]  %s2, 1024, %s42, [#allocation7], 64, 64, 4
    $region13: #{tpu_custom_call.1} parent=1 // pred_fallthru
      _
    // Predicated region
    $region14: #{tpu_custom_call.1} parent=1 // pred_check
      _
    $region15: #{tpu_custom_call.1} parent=1 // pred_check_branch
      %49 = sbr.rel (0) target = $region17
    $region16: #{tpu_custom_call.1} parent=1 // pred_region
      _
    $region17: #{tpu_custom_call.1} parent=1 // pred_fallthru
      _
    // Predicated region
    $region18: #{tpu_custom_call.1} parent=1 // pred_check
      _
    $region19: #{tpu_custom_call.1} parent=1 // pred_check_branch
      %51 = sbr.rel (0) target = $region21
    $region20: #{tpu_custom_call.1} parent=1 // pred_region
      %52 = dma.done [#allocation4], 128
    $region21: #{tpu_custom_call.1} parent=1 // pred_fallthru
      _
    // Predicated region
    $region22: #{tpu_custom_call.1} parent=1 // pred_check
      _
    $region23: #{tpu_custom_call.1} parent=1 // pred_check_branch
      %54 = sbr.rel (0) target = $region25
    $region24: #{tpu_custom_call.1} parent=1 // pred_region
      %55 = dma.done [#allocation7], 1024
    $region25: #{tpu_custom_call.1} parent=1 // pred_fallthru
      _
    // Predicated region
    $region26: #{tpu_custom_call.1} parent=1 // pred_check
      _
    $region27: #{tpu_custom_call.1} parent=1 // pred_check_branch
      %57 = sbr.rel (0) target = $region29
    $region28: #{tpu_custom_call.1} parent=1 // pred_region
      %58 = dma.done [#allocation7], 1024
    $region29: #{tpu_custom_call.1} parent=1 // pred_fallthru
      _
    %p60 = scmp.eq.s32.totalorder 0, 0
    // Predicated region
    $region30: #{tpu_custom_call.1} parent=1 // pred_check
      %p61 = pneg %p60
    $region31: #{tpu_custom_call.1} parent=1 // pred_check_branch
      %63 = sbr.rel (%p61) target = $region33
    $region32: #{tpu_custom_call.1} parent=1 // pred_region
      %v64 = vld [vmem:[#allocation3] sm:$0xf]
      %v65 = vld [vmem:[#allocation3 + $0x4] sm:$0xf]
      %v66 = vld [vmem:[#allocation6] sm:$0xf]
      %v67 = vld [vmem:[#allocation6 + $0x4] sm:$0xf]
      %v68 = vld [vmem:[#allocation6 + $0x8] sm:$0xf]
      %v69 = vld [vmem:[#allocation6 + $0xc] sm:$0xf]
      %v70 = vld [vmem:[#allocation6 + $0x10] sm:$0xf]
      %v71 = vld [vmem:[#allocation6 + $0x14] sm:$0xf]
      %v72 = vld [vmem:[#allocation6 + $0x18] sm:$0xf]
      %v73 = vld [vmem:[#allocation6 + $0x1c] sm:$0xf]
      %v74 = vld [vmem:[#allocation6 + $0x20] sm:$0xf]
      %v75 = vld [vmem:[#allocation6 + $0x24] sm:$0xf]
      %v76 = vld [vmem:[#allocation6 + $0x28] sm:$0xf]
      %v77 = vld [vmem:[#allocation6 + $0x2c] sm:$0xf]
      %v78 = vld [vmem:[#allocation6 + $0x30] sm:$0xf]
      %v79 = vld [vmem:[#allocation6 + $0x34] sm:$0xf]
      %v80 = vld [vmem:[#allocation6 + $0x38] sm:$0xf]
      %v81 = vld [vmem:[#allocation6 + $0x3c] sm:$0xf]
      %v84 = vunpack.c.l.b16 %v64
      %v85 = vunpack.c.l.b16 %v65
      %v86 = vpack.c.b16 %v85, %v84
      %v104 = vunpack.c.l.b16 %v66
      %v105 = vunpack.c.l.b16 %v67
      %v106 = vunpack.c.l.b16 %v68
      %v107 = vunpack.c.l.b16 %v69
      %v108 = vunpack.c.l.b16 %v70
      %v109 = vunpack.c.l.b16 %v71
      %v110 = vunpack.c.l.b16 %v72
      %v111 = vunpack.c.l.b16 %v73
      %v112 = vunpack.c.l.b16 %v74
      %v113 = vunpack.c.l.b16 %v75
      %v114 = vunpack.c.l.b16 %v76
      %v115 = vunpack.c.l.b16 %v77
      %v116 = vunpack.c.l.b16 %v78
      %v117 = vunpack.c.l.b16 %v79
      %v118 = vunpack.c.l.b16 %v80
      %v119 = vunpack.c.l.b16 %v81
      %v120 = vpack.c.b16 %v105, %v104
      %v121 = vpack.c.b16 %v107, %v106
      %v122 = vpack.c.b16 %v109, %v108
      %v123 = vpack.c.b16 %v111, %v110
      %v124 = vpack.c.b16 %v113, %v112
      %v125 = vpack.c.b16 %v115, %v114
      %v126 = vpack.c.b16 %v117, %v116
      %v127 = vpack.c.b16 %v119, %v118
      %136 = vmatprep.subr.bf16.mxu0 0
      %137 = vmatpush1.bf16.msra.mxu0 %v127
      %138 = vmatprep.subr.bf16.mxu0 0
      %139 = vmatpush1.bf16.msra.mxu0 %v126
      %140 = vmatprep.subr.bf16.mxu0 0
      %141 = vmatpush1.bf16.msra.mxu0 %v125
      %142 = vmatprep.subr.bf16.mxu0 0
      %143 = vmatpush1.bf16.msra.mxu0 %v124
      %144 = vmatprep.subr.bf16.mxu0 0
      %145 = vmatpush1.bf16.msra.mxu0 %v123
      %146 = vmatprep.subr.bf16.mxu0 0
      %147 = vmatpush1.bf16.msra.mxu0 %v122
      %148 = vmatprep.subr.bf16.mxu0 0
      %149 = vmatpush1.bf16.msra.mxu0 %v121
      %150 = vmatprep.subr.bf16.mxu0 0
      %151 = vmatpush1.bf16.msra.mxu0 %v120
      %152 = vmatprep.subr.bf16.mxu0 0
      %153 = vmatpush2.bf16.msra.mxu0 0
      %154 = vmatprep.subr.bf16.mxu0 0
      %155 = vmatpush2.bf16.msra.mxu0 0
      %156 = vmatprep.subr.bf16.mxu0 0
      %157 = vmatpush2.bf16.msra.mxu0 0
      %158 = vmatprep.subr.bf16.mxu0 0
      %159 = vmatpush2.bf16.msra.mxu0 0
      %160 = vmatprep.subr.bf16.mxu0 0
      %161 = vmatpush2.bf16.msra.mxu0 0
      %162 = vmatprep.subr.bf16.mxu0 0
      %163 = vmatpush2.bf16.msra.mxu0 0
      %164 = vmatprep.subr.bf16.mxu0 0
      %165 = vmatpush2.bf16.msra.mxu0 0
      %166 = vmatprep.subr.bf16.mxu0 0
      %167 = vmatpush2.bf16.msra.mxu0 0
      %168 = vmatprep.mubr.bf16.mxu0 0
      %169 = vmatmul.mubr.bf16.gmra.mxu0 %v86
      %v170 = vpop.f32.mrf.mxu0
      %v171 = vadd.f32 0.0, %v170
      %v172 = vpop.f32.mrf.mxu0
      %v173 = vpop.f32.mrf.mxu0
      %v174 = vadd.f32 0.0, %v173
      %v175 = vpop.f32.mrf.mxu0
      %176 = vdwg.mxu0
      %v177 = vpack.c.bf16 %v174, %v171
      %v179 = vunpack.c.l.b16 %v177
      %v180 = vunpack.c.h.b16 %v177
      %v181 = vpack.c.b16 %v179, %v179
      %v182 = vpack.c.b16 %v180, %v180
      %185 = vst [vmem:[#allocation2] sm:$0xf] %v181
      %186 = vst [vmem:[#allocation2 + $0x4] sm:$0xf] %v182
    $region33: #{tpu_custom_call.1} parent=1 // pred_fallthru
      _
    %v187 = vld [vmem:[#allocation2] sm:$0xf]
    %v188 = vld [vmem:[#allocation2 + $0x4] sm:$0xf]
    %v189 = vld [vmem:[#allocation8] sm:$0xf]
    %v190 = vld [vmem:[#allocation8 + $0x4] sm:$0xf]
    %v191 = vld [vmem:[#allocation8 + $0x8] sm:$0xf]
    %v192 = vld [vmem:[#allocation8 + $0xc] sm:$0xf]
    %v193 = vld [vmem:[#allocation8 + $0x10] sm:$0xf]
    %v194 = vld [vmem:[#allocation8 + $0x14] sm:$0xf]
    %v195 = vld [vmem:[#allocation8 + $0x18] sm:$0xf]
    %v196 = vld [vmem:[#allocation8 + $0x1c] sm:$0xf]
    %v197 = vld [vmem:[#allocation8 + $0x20] sm:$0xf]
    %v198 = vld [vmem:[#allocation8 + $0x24] sm:$0xf]
    %v199 = vld [vmem:[#allocation8 + $0x28] sm:$0xf]
    %v200 = vld [vmem:[#allocation8 + $0x2c] sm:$0xf]
    %v201 = vld [vmem:[#allocation8 + $0x30] sm:$0xf]
    %v202 = vld [vmem:[#allocation8 + $0x34] sm:$0xf]
    %v203 = vld [vmem:[#allocation8 + $0x38] sm:$0xf]
    %v204 = vld [vmem:[#allocation8 + $0x3c] sm:$0xf]
    %v205 = vld [vmem:[%s3] sm:$0x1]
    %v207 = vlaneseq
    %v208 = vshrl.u32 %v207, 7
    %v209 = vsub.s32 0, %v208
    %v210 = vrot.slane %v205, %v209
    %v214 = vunpack.c.l.b16 %v187
    %v215 = vunpack.c.l.b16 %v188
    %v216 = vpack.c.b16 %v215, %v214
    %v234 = vunpack.c.l.b16 %v189
    %v235 = vunpack.c.l.b16 %v190
    %v236 = vunpack.c.l.b16 %v191
    %v237 = vunpack.c.l.b16 %v192
    %v238 = vunpack.c.l.b16 %v193
    %v239 = vunpack.c.l.b16 %v194
    %v240 = vunpack.c.l.b16 %v195
    %v241 = vunpack.c.l.b16 %v196
    %v242 = vunpack.c.l.b16 %v197
    %v243 = vunpack.c.l.b16 %v198
    %v244 = vunpack.c.l.b16 %v199
    %v245 = vunpack.c.l.b16 %v200
    %v246 = vunpack.c.l.b16 %v201
    %v247 = vunpack.c.l.b16 %v202
    %v248 = vunpack.c.l.b16 %v203
    %v249 = vunpack.c.l.b16 %v204
    %v250 = vpack.c.b16 %v235, %v234
    %v251 = vpack.c.b16 %v237, %v236
    %v252 = vpack.c.b16 %v239, %v238
    %v253 = vpack.c.b16 %v241, %v240
    %v254 = vpack.c.b16 %v243, %v242
    %v255 = vpack.c.b16 %v245, %v244
    %v256 = vpack.c.b16 %v247, %v246
    %v257 = vpack.c.b16 %v249, %v248
    %266 = vmatprep.subr.bf16.mxu0 0
    %267 = vmatpush1.bf16.msra.mxu0 %v257
    %268 = vmatprep.subr.bf16.mxu0 0
    %269 = vmatpush1.bf16.msra.mxu0 %v256
    %270 = vmatprep.subr.bf16.mxu0 0
    %271 = vmatpush1.bf16.msra.mxu0 %v255
    %272 = vmatprep.subr.bf16.mxu0 0
    %273 = vmatpush1.bf16.msra.mxu0 %v254
    %274 = vmatprep.subr.bf16.mxu0 0
    %275 = vmatpush1.bf16.msra.mxu0 %v253
    %276 = vmatprep.subr.bf16.mxu0 0
    %277 = vmatpush1.bf16.msra.mxu0 %v252
    %278 = vmatprep.subr.bf16.mxu0 0
    %279 = vmatpush1.bf16.msra.mxu0 %v251
    %280 = vmatprep.subr.bf16.mxu0 0
    %281 = vmatpush1.bf16.msra.mxu0 %v250
    %282 = vmatprep.subr.bf16.mxu0 0
    %283 = vmatpush2.bf16.msra.mxu0 0
    %284 = vmatprep.subr.bf16.mxu0 0
    %285 = vmatpush2.bf16.msra.mxu0 0
    %286 = vmatprep.subr.bf16.mxu0 0
    %287 = vmatpush2.bf16.msra.mxu0 0
    %288 = vmatprep.subr.bf16.mxu0 0
    %289 = vmatpush2.bf16.msra.mxu0 0
    %290 = vmatprep.subr.bf16.mxu0 0
    %291 = vmatpush2.bf16.msra.mxu0 0
    %292 = vmatprep.subr.bf16.mxu0 0
    %293 = vmatpush2.bf16.msra.mxu0 0
    %294 = vmatprep.subr.bf16.mxu0 0
    %295 = vmatpush2.bf16.msra.mxu0 0
    %296 = vmatprep.subr.bf16.mxu0 0
    %297 = vmatpush2.bf16.msra.mxu0 0
    %298 = vmatprep.mubr.bf16.mxu0 0
    %299 = vmatmul.mubr.bf16.gmra.mxu0 %v216
    %v300 = vpop.f32.mrf.mxu0
    %v301 = vadd.f32 %v210, %v300
    %v302 = vpop.f32.mrf.mxu0
    %v303 = vpop.f32.mrf.mxu0
    %v304 = vadd.f32 %v210, %v303
    %v305 = vpop.f32.mrf.mxu0
    %306 = vdwg.mxu0
    %307 = vst [vmem:[#allocation9] sm:$0xff] %v301
    %308 = vst [vmem:[#allocation9 + $0x8] sm:$0xff] %v304
    // Predicated region
    $region34: #{tpu_custom_call.1} parent=1 // pred_check
      _
    $region35: #{tpu_custom_call.1} parent=1 // pred_check_branch
      %310 = sbr.rel (0) target = $region37
    $region36: #{tpu_custom_call.1} parent=1 // pred_region
      %s312 = ssub.s32 256, 256
      %313 = vsyncadd [#allocation5], %s312
      %s314 = sshll.u32 [#allocation9], 4
      %s315 = int_to_ptr.vmem [resolvable:$true] %s314
      %320 = dma.vmem_to_hbm [thread:$0]  %s315, 256, %s4, [#allocation5], 128, 128, 8
    $region37: #{tpu_custom_call.1} parent=1 // pred_fallthru
      _
    // Predicated region
    $region38: #{tpu_custom_call.1} parent=1 // pred_check
      _
    $region39: #{tpu_custom_call.1} parent=1 // pred_check_branch
      %322 = sbr.rel (0) target = $region41
    $region40: #{tpu_custom_call.1} parent=1 // pred_region
      %323 = dma.done [#allocation5], 256
    $region41: #{tpu_custom_call.1} parent=1 // pred_fallthru
      _
    %324 = vsyncpa [#allocation4], 1
    %325 = vsyncpa [#allocation7], 1
    %326 = vsyncpa [#allocation5], 1

// kernel: tpu_custom_call.1
$region0: #{tpu_custom_call.1}
  #allocation0 [shape = 'u32[]', space=smem, size = 0x4, offset = 0x4, fixed_abs, tag = 'smem constant byte address 0x4 - core index']
  #allocation1 [shape = 'u32[144,128]{1,0:T(1,128)}', space=vmem, size = 0x12000, scoped, tag = 'internal scratch']
  #allocation2 [shape = 'bf16[16,128]{1,0:T(8,128)(2,1)}', space=vmem, size = 0x1000, scoped, tag = 'scratch operand']
  %s0 = inlined_call_operand.hbm [shape: bf16[16,128], index: 0, kind: input, shape index: {}]
  %s1 = inlined_call_operand.hbm [shape: bf16[128,128], index: 1, kind: input, shape index: {}]
  %s2 = inlined_call_operand.hbm [shape: bf16[128,128], index: 2, kind: input, shape index: {}]
  %s3 = inlined_call_operand.vmem [shape: f32[1,128], index: 3, kind: input, shape index: {}]
  %s4 = inlined_call_operand.hbm [shape: f32[16,128], index: 4, kind: output, shape index: {}]
  %s5 = sld [smem:[#allocation0]]
  $region42: #{tpu_custom_call.1} parent=0
    _
  %s7 = ssub.s32 1, %s5
  %s8 = scalar_select 0, %s7, %s5
  $region1: #{tpu_custom_call.1} parent=0
    #allocation3 [shape = 'u8[4096]{0}', space=vmem, size = 0x1000, scoped, tag = 'input window, operand 0, single buffered']
    #allocation4 [shape = 's32[1]{0}', space=sflag, size = 0x4, scoped, tag = 'scoped memory for tpu_custom_call.1']
    #allocation5 [shape = 's32[1]{0}', space=sflag, size = 0x4, scoped, tag = 'scoped memory for tpu_custom_call.1']
    #allocation6 [shape = 'u8[32768]{0}', space=vmem, size = 0x8000, scoped, tag = 'input window, operand 1, single buffered']
    #allocation7 [shape = 's32[1]{0}', space=sflag, size = 0x4, scoped, tag = 'scoped memory for tpu_custom_call.1']
    #allocation8 [shape = 'u8[32768]{0}', space=vmem, size = 0x8000, scoped, tag = 'input window, operand 2, single buffered']
    #allocation9 [shape = 'u8[8192]{0}', space=vmem, size = 0x2000, scoped, tag = 'output window, operand 0, single buffered']
    %9 = vsyncpa [#allocation4], 0
    %10 = vsyncpa [#allocation7], 0
    %11 = vsyncpa [#allocation5], 0
    // Predicated region
    $region2: #{tpu_custom_call.1} parent=1 // pred_check
      _
    $region3: #{tpu_custom_call.1} parent=1 // pred_check_branch
      %13 = sbr.rel (0) target = $region5
    $region4: #{tpu_custom_call.1} parent=1 // pred_region
      %s15 = ssub.s32 128, 128
      %16 = vsyncadd [#allocation4], %s15
      %s17 = sshll.u32 [#allocation3], 4
      %s18 = int_to_ptr.vmem [resolvable:$true] %s17
      %23 = dma.hbm_to_vmem [thread:$0]  %s0, 128, %s18, [#allocation4], 64, 64, 4
    $region5: #{tpu_custom_call.1} parent=1 // pred_fallthru
      _
    // Predicated region
    $region6: #{tpu_custom_call.1} parent=1 // pred_check
      _
    $region7: #{tpu_custom_call.1} parent=1 // pred_check_branch
      %25 = sbr.rel (0) target = $region9
    $region8: #{tpu_custom_call.1} parent=1 // pred_region
      %s27 = ssub.s32 1024, 1024
      %28 = vsyncadd [#allocation7], %s27
      %s29 = sshll.u32 [#allocation6], 4
      %s30 = int_to_ptr.vmem [resolvable:$true] %s29
      %35 = dma.hbm_to_vmem [thread:$0]  %s1, 1024, %s30, [#allocation7], 64, 64, 4
    $region9: #{tpu_custom_call.1} parent=1 // pred_fallthru
      _
    // Predicated region
    $region10: #{tpu_custom_call.1} parent=1 // pred_check
      _
    $region11: #{tpu_custom_call.1} parent=1 // pred_check_branch
      %37 = sbr.rel (0) target = $region13
    $region12: #{tpu_custom_call.1} parent=1 // pred_region
      %s39 = ssub.s32 1024, 1024
      %40 = vsyncadd [#allocation7], %s39
      %s41 = sshll.u32 [#allocation8], 4
      %s42 = int_to_ptr.vmem [resolvable:$true] %s41
      %47 = dma.hbm_to_vmem [thread:$0]  %s2, 1024, %s42, [#allocation7], 64, 64, 4
    $region13: #{tpu_custom_call.1} parent=1 // pred_fallthru
      _
    // Predicated region
    $region14: #{tpu_custom_call.1} parent=1 // pred_check
      _
    $region15: #{tpu_custom_call.1} parent=1 // pred_check_branch
      %49 = sbr.rel (0) target = $region17
    $region16: #{tpu_custom_call.1} parent=1 // pred_region
      _
    $region17: #{tpu_custom_call.1} parent=1 // pred_fallthru
      _
    // Predicated region
    $region18: #{tpu_custom_call.1} parent=1 // pred_check
      _
    $region19: #{tpu_custom_call.1} parent=1 // pred_check_branch
      %51 = sbr.rel (0) target = $region21
    $region20: #{tpu_custom_call.1} parent=1 // pred_region
      %52 = dma.done [#allocation4], 128
    $region21: #{tpu_custom_call.1} parent=1 // pred_fallthru
      _
    // Predicated region
    $region22: #{tpu_custom_call.1} parent=1 // pred_check
      _
    $region23: #{tpu_custom_call.1} parent=1 // pred_check_branch
      %54 = sbr.rel (0) target = $region25
    $region24: #{tpu_custom_call.1} parent=1 // pred_region
      %55 = dma.done [#allocation7], 1024
    $region25: #{tpu_custom_call.1} parent=1 // pred_fallthru
      _
    // Predicated region
    $region26: #{tpu_custom_call.1} parent=1 // pred_check
      _
    $region27: #{tpu_custom_call.1} parent=1 // pred_check_branch
      %57 = sbr.rel (0) target = $region29
    $region28: #{tpu_custom_call.1} parent=1 // pred_region
      %58 = dma.done [#allocation7], 1024
    $region29: #{tpu_custom_call.1} parent=1 // pred_fallthru
      _
    %p60 = scmp.eq.s32.totalorder 0, 0
    // Predicated region
    $region30: #{tpu_custom_call.1} parent=1 // pred_check
      %p61 = pneg %p60
    $region31: #{tpu_custom_call.1} parent=1 // pred_check_branch
      %63 = sbr.rel (%p61) target = $region33
    $region32: #{tpu_custom_call.1} parent=1 // pred_region
      %v64 = vld [vmem:[#allocation3] sm:$0xf]
      %v65 = vld [vmem:[#allocation3 + $0x4] sm:$0xf]
      %v66 = vld [vmem:[#allocation6] sm:$0xf]
      %v67 = vld [vmem:[#allocation6 + $0x4] sm:$0xf]
      %v68 = vld [vmem:[#allocation6 + $0x8] sm:$0xf]
      %v69 = vld [vmem:[#allocation6 + $0xc] sm:$0xf]
      %v70 = vld [vmem:[#allocation6 + $0x10] sm:$0xf]
      %v71 = vld [vmem:[#allocation6 + $0x14] sm:$0xf]
      %v72 = vld [vmem:[#allocation6 + $0x18] sm:$0xf]
      %v73 = vld [vmem:[#allocation6 + $0x1c] sm:$0xf]
      %v74 = vld [vmem:[#allocation6 + $0x20] sm:$0xf]
      %v75 = vld [vmem:[#allocation6 + $0x24] sm:$0xf]
      %v76 = vld [vmem:[#allocation6 + $0x28] sm:$0xf]
      %v77 = vld [vmem:[#allocation6 + $0x2c] sm:$0xf]
      %v78 = vld [vmem:[#allocation6 + $0x30] sm:$0xf]
      %v79 = vld [vmem:[#allocation6 + $0x34] sm:$0xf]
      %v80 = vld [vmem:[#allocation6 + $0x38] sm:$0xf]
      %v81 = vld [vmem:[#allocation6 + $0x3c] sm:$0xf]
      %v84 = vunpack.c.l.b16 %v64
      %v85 = vunpack.c.l.b16 %v65
      %v86 = vpack.c.b16 %v85, %v84
      %v104 = vunpack.c.l.b16 %v66
      %v105 = vunpack.c.l.b16 %v67
      %v106 = vunpack.c.l.b16 %v68
      %v107 = vunpack.c.l.b16 %v69
      %v108 = vunpack.c.l.b16 %v70
      %v109 = vunpack.c.l.b16 %v71
      %v110 = vunpack.c.l.b16 %v72
      %v111 = vunpack.c.l.b16 %v73
      %v112 = vunpack.c.l.b16 %v74
      %v113 = vunpack.c.l.b16 %v75
      %v114 = vunpack.c.l.b16 %v76
      %v115 = vunpack.c.l.b16 %v77
      %v116 = vunpack.c.l.b16 %v78
      %v117 = vunpack.c.l.b16 %v79
      %v118 = vunpack.c.l.b16 %v80
      %v119 = vunpack.c.l.b16 %v81
      %v120 = vpack.c.b16 %v105, %v104
      %v121 = vpack.c.b16 %v107, %v106
      %v122 = vpack.c.b16 %v109, %v108
      %v123 = vpack.c.b16 %v111, %v110
      %v124 = vpack.c.b16 %v113, %v112
      %v125 = vpack.c.b16 %v115, %v114
      %v126 = vpack.c.b16 %v117, %v116
      %v127 = vpack.c.b16 %v119, %v118
      %136 = vmatprep.subr.bf16.mxu0 0
      %137 = vmatpush1.bf16.msra.mxu0 %v127
      %138 = vmatprep.subr.bf16.mxu0 0
      %139 = vmatpush1.bf16.msra.mxu0 %v126
      %140 = vmatprep.subr.bf16.mxu0 0
      %141 = vmatpush1.bf16.msra.mxu0 %v125
      %142 = vmatprep.subr.bf16.mxu0 0
      %143 = vmatpush1.bf16.msra.mxu0 %v124
      %144 = vmatprep.subr.bf16.mxu0 0
      %145 = vmatpush1.bf16.msra.mxu0 %v123
      %146 = vmatprep.subr.bf16.mxu0 0
      %147 = vmatpush1.bf16.msra.mxu0 %v122
      %148 = vmatprep.subr.bf16.mxu0 0
      %149 = vmatpush1.bf16.msra.mxu0 %v121
      %150 = vmatprep.subr.bf16.mxu0 0
      %151 = vmatpush1.bf16.msra.mxu0 %v120
      %152 = vmatprep.subr.bf16.mxu0 0
      %153 = vmatpush2.bf16.msra.mxu0 0
      %154 = vmatprep.subr.bf16.mxu0 0
      %155 = vmatpush2.bf16.msra.mxu0 0
      %156 = vmatprep.subr.bf16.mxu0 0
      %157 = vmatpush2.bf16.msra.mxu0 0
      %158 = vmatprep.subr.bf16.mxu0 0
      %159 = vmatpush2.bf16.msra.mxu0 0
      %160 = vmatprep.subr.bf16.mxu0 0
      %161 = vmatpush2.bf16.msra.mxu0 0
      %162 = vmatprep.subr.bf16.mxu0 0
      %163 = vmatpush2.bf16.msra.mxu0 0
      %164 = vmatprep.subr.bf16.mxu0 0
      %165 = vmatpush2.bf16.msra.mxu0 0
      %166 = vmatprep.subr.bf16.mxu0 0
      %167 = vmatpush2.bf16.msra.mxu0 0
      %168 = vmatprep.mubr.bf16.mxu0 0
      %169 = vmatmul.mubr.bf16.gmra.mxu0 %v86
      %v170 = vpop.f32.mrf.mxu0
      %v171 = vadd.f32 0.0, %v170
      %v172 = vpop.f32.mrf.mxu0
      %v173 = vpop.f32.mrf.mxu0
      %v174 = vadd.f32 0.0, %v173
      %v175 = vpop.f32.mrf.mxu0
      %176 = vdwg.mxu0
      %v177 = vpack.c.bf16 %v174, %v171
      %v179 = vunpack.c.l.b16 %v177
      %v180 = vunpack.c.h.b16 %v177
      %v181 = vpack.c.b16 %v179, %v179
      %v182 = vpack.c.b16 %v180, %v180
      %185 = vst [vmem:[#allocation2] sm:$0xf] %v181
      %186 = vst [vmem:[#allocation2 + $0x4] sm:$0xf] %v182
    $region33: #{tpu_custom_call.1} parent=1 // pred_fallthru
      _
    %v187 = vld [vmem:[#allocation2] sm:$0xf]
    %v188 = vld [vmem:[#allocation2 + $0x4] sm:$0xf]
    %v189 = vld [vmem:[#allocation8] sm:$0xf]
    %v190 = vld [vmem:[#allocation8 + $0x4] sm:$0xf]
    %v191 = vld [vmem:[#allocation8 + $0x8] sm:$0xf]
    %v192 = vld [vmem:[#allocation8 + $0xc] sm:$0xf]
    %v193 = vld [vmem:[#allocation8 + $0x10] sm:$0xf]
    %v194 = vld [vmem:[#allocation8 + $0x14] sm:$0xf]
    %v195 = vld [vmem:[#allocation8 + $0x18] sm:$0xf]
    %v196 = vld [vmem:[#allocation8 + $0x1c] sm:$0xf]
    %v197 = vld [vmem:[#allocation8 + $0x20] sm:$0xf]
    %v198 = vld [vmem:[#allocation8 + $0x24] sm:$0xf]
    %v199 = vld [vmem:[#allocation8 + $0x28] sm:$0xf]
    %v200 = vld [vmem:[#allocation8 + $0x2c] sm:$0xf]
    %v201 = vld [vmem:[#allocation8 + $0x30] sm:$0xf]
    %v202 = vld [vmem:[#allocation8 + $0x34] sm:$0xf]
    %v203 = vld [vmem:[#allocation8 + $0x38] sm:$0xf]
    %v204 = vld [vmem:[#allocation8 + $0x3c] sm:$0xf]
    %v205 = vld [vmem:[%s3] sm:$0x1]
    %v207 = vlaneseq
    %v208 = vshrl.u32 %v207, 7
    %v209 = vsub.s32 0, %v208
    %v210 = vrot.slane %v205, %v209
    %v214 = vunpack.c.l.b16 %v187
    %v215 = vunpack.c.l.b16 %v188
    %v216 = vpack.c.b16 %v215, %v214
    %v234 = vunpack.c.l.b16 %v189
    %v235 = vunpack.c.l.b16 %v190
    %v236 = vunpack.c.l.b16 %v191
    %v237 = vunpack.c.l.b16 %v192
    %v238 = vunpack.c.l.b16 %v193
    %v239 = vunpack.c.l.b16 %v194
    %v240 = vunpack.c.l.b16 %v195
    %v241 = vunpack.c.l.b16 %v196
    %v242 = vunpack.c.l.b16 %v197
    %v243 = vunpack.c.l.b16 %v198
    %v244 = vunpack.c.l.b16 %v199
    %v245 = vunpack.c.l.b16 %v200
    %v246 = vunpack.c.l.b16 %v201
    %v247 = vunpack.c.l.b16 %v202
    %v248 = vunpack.c.l.b16 %v203
    %v249 = vunpack.c.l.b16 %v204
    %v250 = vpack.c.b16 %v235, %v234
    %v251 = vpack.c.b16 %v237, %v236
    %v252 = vpack.c.b16 %v239, %v238
    %v253 = vpack.c.b16 %v241, %v240
    %v254 = vpack.c.b16 %v243, %v242
    %v255 = vpack.c.b16 %v245, %v244
    %v256 = vpack.c.b16 %v247, %v246
    %v257 = vpack.c.b16 %v249, %v248
    %266 = vmatprep.subr.bf16.mxu0 0
    %267 = vmatpush1.bf16.msra.mxu0 %v257
    %268 = vmatprep.subr.bf16.mxu0 0
    %269 = vmatpush1.bf16.msra.mxu0 %v256
    %270 = vmatprep.subr.bf16.mxu0 0
    %271 = vmatpush1.bf16.msra.mxu0 %v255
    %272 = vmatprep.subr.bf16.mxu0 0
    %273 = vmatpush1.bf16.msra.mxu0 %v254
    %274 = vmatprep.subr.bf16.mxu0 0
    %275 = vmatpush1.bf16.msra.mxu0 %v253
    %276 = vmatprep.subr.bf16.mxu0 0
    %277 = vmatpush1.bf16.msra.mxu0 %v252
    %278 = vmatprep.subr.bf16.mxu0 0
    %279 = vmatpush1.bf16.msra.mxu0 %v251
    %280 = vmatprep.subr.bf16.mxu0 0
    %281 = vmatpush1.bf16.msra.mxu0 %v250
    %282 = vmatprep.subr.bf16.mxu0 0
    %283 = vmatpush2.bf16.msra.mxu0 0
    %284 = vmatprep.subr.bf16.mxu0 0
    %285 = vmatpush2.bf16.msra.mxu0 0
    %286 = vmatprep.subr.bf16.mxu0 0
    %287 = vmatpush2.bf16.msra.mxu0 0
    %288 = vmatprep.subr.bf16.mxu0 0
    %289 = vmatpush2.bf16.msra.mxu0 0
    %290 = vmatprep.subr.bf16.mxu0 0
    %291 = vmatpush2.bf16.msra.mxu0 0
    %292 = vmatprep.subr.bf16.mxu0 0
    %293 = vmatpush2.bf16.msra.mxu0 0
    %294 = vmatprep.subr.bf16.mxu0 0
    %295 = vmatpush2.bf16.msra.mxu0 0
    %296 = vmatprep.subr.bf16.mxu0 0
    %297 = vmatpush2.bf16.msra.mxu0 0
    %298 = vmatprep.mubr.bf16.mxu0 0
    %299 = vmatmul.mubr.bf16.gmra.mxu0 %v216
    %v300 = vpop.f32.mrf.mxu0
    %v301 = vadd.f32 %v210, %v300
    %v302 = vpop.f32.mrf.mxu0
    %v303 = vpop.f32.mrf.mxu0
    %v304 = vadd.f32 %v210, %v303
    %v305 = vpop.f32.mrf.mxu0
    %306 = vdwg.mxu0
    %307 = vst [vmem:[#allocation9] sm:$0xff] %v301
    %308 = vst [vmem:[#allocation9 + $0x8] sm:$0xff] %v304
    // Predicated region
    $region34: #{tpu_custom_call.1} parent=1 // pred_check
      _
    $region35: #{tpu_custom_call.1} parent=1 // pred_check_branch
      %310 = sbr.rel (0) target = $region37
    $region36: #{tpu_custom_call.1} parent=1 // pred_region
      %s312 = ssub.s32 256, 256
      %313 = vsyncadd [#allocation5], %s312
      %s314 = sshll.u32 [#allocation9], 4
      %s315 = int_to_ptr.vmem [resolvable:$true] %s314
      %320 = dma.vmem_to_hbm [thread:$0]  %s315, 256, %s4, [#allocation5], 128, 128, 8
    $region37: #{tpu_custom_call.1} parent=1 // pred_fallthru
      _
    // Predicated region
    $region38: #{tpu_custom_call.1} parent=1 // pred_check
      _
    $region39: #{tpu_custom_call.1} parent=1 // pred_check_branch
      %322 = sbr.rel (0) target = $region41
    $region40: #{tpu_custom_call.1} parent=1 // pred_region
      %323 = dma.done [#allocation5], 256
    $region41: #{tpu_custom_call.1} parent=1 // pred_fallthru
      _
    %324 = vsyncpa [#allocation4], 1
    %325 = vsyncpa [#allocation7], 1
    %326 = vsyncpa [#allocation5], 1

</llo_original>
